<compile_context>
chip_gen: v7x
topology: tpu7x:2x2x1
jax: 0.10.0
libtpu: 0.0.40
codegen_flags: <defaults>
</compile_context>

<pallas_src>
import functools

import jax
import jax.numpy as jnp
from jax import lax
from jax.experimental import pallas as pl
from jax.experimental.pallas import tpu as pltpu

EPS = 1e-5


class FLAGS(object):
    width_mult_list = [0.25, 0.5, 0.75, 1.0]
    width_mult = 1.0


# --------------------------------------------------------------------------
# small host-side helpers
# --------------------------------------------------------------------------
def _cdiv(a, b):
    return -(-a // b)


def _round_up(a, b):
    return _cdiv(a, b) * b


def _sublane_align(dtype):
    itemsize = jnp.dtype(dtype).itemsize
    return {4: 8, 2: 16, 1: 32}.get(itemsize, 8)


def _vmem_config():
    """(vmem_limit_bytes, per-block byte target) tuned per TPU generation."""
    try:
        cap = int(pltpu.get_tpu_info().vmem_capacity_bytes)
    except Exception:
        cap = 64 * 1024 * 1024                      # conservative (v7x-sized)
    limit = min(cap * 3 // 4, 100 * 1024 * 1024)    # 48 MiB v7x / 96 MiB v5e,v6e
    tile_budget = (8 * 1024 * 1024 if limit >= 64 * 1024 * 1024
                   else 4 * 1024 * 1024)
    return limit, tile_budget


def _maybe_buffered(block_shape, index_map, nbuf):
    """BlockSpec with deeper input pipelining when the API supports it."""
    try:
        return pl.BlockSpec(block_shape, index_map,
                            pipeline_mode=pl.Buffered(nbuf))
    except Exception:
        return pl.BlockSpec(block_shape, index_map)


def _pick_fused_c_tile(N, C, HW, elem, align, vmem_limit, total_bytes):
    """Largest channel tile whose resident slab (+buffering) fits VMEM."""
    budget = vmem_limit - 4 * 1024 * 1024           # headroom for misc scratch
    if budget <= 0:
        return None
    # 2x double-buffered input + 2x output (native dtype) + ~2 f32 temporaries
    per_chan = N * HW * (4 * elem + 8)
    if C * per_chan <= budget:
        c_tile = C
    else:
        c_tile = (budget // per_chan) // align * align
        if c_tile <= 0:
            return None
    # make sure the "parallel" channel axis has >=2 blocks on multi-TC parts
    if total_bytes > 8 * 1024 * 1024 and _cdiv(C, c_tile) == 1 and C >= 2 * align:
        c_tile = _round_up(_cdiv(C, 2), align)
    return c_tile


# --------------------------------------------------------------------------
# kernels
# --------------------------------------------------------------------------
def _fused_bn_kernel(x_ref, gw_ref, gb_ref, o_ref, *, count):
    """Single-read conditional BN on a resident channel slab.

    x_ref:  (N, c_tile, HW)  activations for one channel tile, whole batch
    gw_ref: (N, c_tile, 1)   gamma * bn_weight          (f32)
    gb_ref: (N, c_tile, 1)   gamma * bn_bias + beta     (f32)
    o_ref:  (N, c_tile, HW)
    """
    x = x_ref[...].astype(jnp.float32)
    s_n = jnp.sum(x, axis=2, keepdims=True)             # (N, ct, 1)
    ss_n = jnp.sum(x * x, axis=2, keepdims=True)        # (N, ct, 1)
    s = jnp.sum(s_n, axis=0, keepdims=True)             # (1, ct, 1)
    ss = jnp.sum(ss_n, axis=0, keepdims=True)           # (1, ct, 1)
    inv_count = 1.0 / count
    mean = s * inv_count
    var = jnp.maximum(ss * inv_count - mean * mean, 0.0)   # biased variance
    inv_std = lax.rsqrt(var + EPS)                       # (1, ct, 1)
    scale = gw_ref[...] * inv_std                        # (N, ct, 1)
    shift = gb_ref[...] - scale * mean                   # (N, ct, 1)
    o_ref[...] = (x * scale + shift).astype(o_ref.dtype)


def _stats_kernel(x_ref, sum_ref, sumsq_ref, *, tail_cols):
    """Per-row partial sum / sum-of-squares accumulated over the column axis.

    x_ref:     (row_tile, col_tile)  activation tile
    sum_ref:   (row_tile, 1)         running sum   (f32, resident over cols)
    sumsq_ref: (row_tile, 1)         running sumsq (f32, resident over cols)
    Ragged last column block is masked with `tail_cols` valid columns.
    (Ragged rows need no masking: garbage rows only write to out-of-bounds
    output rows, which Pallas drops.)
    """
    @pl.when(pl.program_id(1) == 0)
    def _():
        sum_ref[...] = jnp.zeros_like(sum_ref)
        sumsq_ref[...] = jnp.zeros_like(sumsq_ref)

    def accumulate(xf):
        sum_ref[...] += jnp.sum(xf, axis=1, keepdims=True)
        sumsq_ref[...] += jnp.sum(xf * xf, axis=1, keepdims=True)

    if tail_cols == 0:                                   # fully aligned
        accumulate(x_ref[...].astype(jnp.float32))
    else:
        last = pl.num_programs(1) - 1

        @pl.when(pl.program_id(1) != last)
        def _():
            accumulate(x_ref[...].astype(jnp.float32))

        @pl.when(pl.program_id(1) == last)
        def _():
            xf = x_ref[...].astype(jnp.float32)
            col = lax.broadcasted_iota(jnp.int32, xf.shape, 1)
            accumulate(jnp.where(col < tail_cols, xf, 0.0))


def _normalize_kernel(x_ref, scale_ref, shift_ref, o_ref):
    """out = x * scale + shift; scale/shift are per-row, broadcast over lanes."""
    x = x_ref[...].astype(jnp.float32)
    o_ref[...] = (x * scale_ref[...] + shift_ref[...]).astype(o_ref.dtype)


# --------------------------------------------------------------------------
# forward
# --------------------------------------------------------------------------
def sliceable_cbn_forward(x, y, embed_weight, bn_weights, bn_biases,
                          num_features_list, *, force_streaming=False,
                          _debug_max_tile=None):
    """Forward pass. Embedding gather / affine fold are tiny (N,C) JAX glue;
    all per-element work on the big tensor runs inside Pallas kernels."""
    idx = FLAGS.width_mult_list.index(FLAGS.width_mult)
    c_idx = num_features_list[idx]
    num_features = max(num_features_list)

    N, C, H, W = x.shape
    assert C == c_idx, "input channel count must match the selected width"

    HW = H * W
    R, L = N * C, HW
    elem = jnp.dtype(x.dtype).itemsize
    align = _sublane_align(x.dtype)
    vmem_limit, tile_budget = _vmem_config()
    total_bytes = R * L * elem
    count = float(N * HW)

    # ---- tiny per-(N,C) conditional-affine glue (embedding gather + BN fold)
    emb = embed_weight[y].astype(jnp.float32)               # (N, 2*F)
    gamma = emb[:, :c_idx]                                   # (N, C)
    beta = emb[:, num_features:num_features + c_idx]         # (N, C)
    bn_w = bn_weights[idx].astype(jnp.float32)               # (C,)
    bn_b = bn_biases[idx].astype(jnp.float32)                # (C,)
    gw = gamma * bn_w[None, :]                               # gamma * bn_w
    gb = gamma * bn_b[None, :] + beta                        # gamma * bn_b + beta

    # ======================= fused single-read path ========================
    if not force_streaming:
        c_tile = _pick_fused_c_tile(N, C, HW, elem, align, vmem_limit,
                                    total_bytes)
        if c_tile is not None:
            x3d = x.reshape(N, C, HW)                        # free reshape
            out3d = pl.pallas_call(
                functools.partial(_fused_bn_kernel, count=count),
                grid=(_cdiv(C, c_tile),),
                in_specs=[pl.BlockSpec((N, c_tile, HW), lambda j: (0, j, 0)),
                          pl.BlockSpec((N, c_tile, 1), lambda j: (0, j, 0)),
                          pl.BlockSpec((N, c_tile, 1), lambda j: (0, j, 0))],
                out_specs=pl.BlockSpec((N, c_tile, HW), lambda j: (0, j, 0)),
                out_shape=jax.ShapeDtypeStruct((N, C, HW), x.dtype),
                compiler_params=pltpu.CompilerParams(
                    dimension_semantics=("parallel",),
                    vmem_limit_bytes=vmem_limit),
            )(x3d, gw[:, :, None], gb[:, :, None])
            return out3d.reshape(N, C, H, W)

    # ======================= streaming two-pass path =======================
    x2d = x.reshape(R, L)                                    # free reshape

    # Tiling: full-dim blocks when small (always legal), otherwise
    # (align,128)-aligned blocks sized to ~tile_budget bytes. No jnp.pad, no
    # output slice -> HBM traffic stays at 3x |x|.
    row_cap = 256
    if _debug_max_tile is not None:
        row_cap = max(align, _debug_max_tile[0] // align * align)
    row_tile = R if R <= row_cap else row_cap
    # >=2 blocks on the "parallel" row axis so both TCs work on v7x
    if total_bytes > 8 * 1024 * 1024 and row_tile == R and R >= 2 * align:
        row_tile = _round_up(_cdiv(R, 2), align)

    col_budget = max(128, (tile_budget // (row_tile * elem)) // 128 * 128)
    if _debug_max_tile is not None:
        col_budget = max(128, min(col_budget, _debug_max_tile[1] // 128 * 128))
    col_tile = L if L <= col_budget else col_budget
    tail_cols = 0 if col_tile == L else (L % col_tile)

    grid = (_cdiv(R, row_tile), _cdiv(L, col_tile))
    cparams_stats = pltpu.CompilerParams(
        dimension_semantics=("parallel", "arbitrary"),
        vmem_limit_bytes=vmem_limit)
    cparams_norm = pltpu.CompilerParams(
        dimension_semantics=("parallel", "parallel"),
        vmem_limit_bytes=vmem_limit)

    # ---- pass 1: per-row sum / sumsq in one read of x ----------------------
    row_sum, row_sumsq = pl.pallas_call(
        functools.partial(_stats_kernel, tail_cols=tail_cols),
        grid=grid,
        in_specs=[_maybe_buffered((row_tile, col_tile), lambda i, j: (i, j), 3)],
        out_specs=[pl.BlockSpec((row_tile, 1), lambda i, j: (i, 0)),
                   pl.BlockSpec((row_tile, 1), lambda i, j: (i, 0))],
        out_shape=[jax.ShapeDtypeStruct((R, 1), jnp.float32),
                   jax.ShapeDtypeStruct((R, 1), jnp.float32)],
        compiler_params=cparams_stats,
    )(x2d)

    # ---- tiny per-(N,C) glue: global batch stats + folded affine -----------
    ch_sum = row_sum[:, 0].reshape(N, C).sum(axis=0)         # (C,)
    ch_sumsq = row_sumsq[:, 0].reshape(N, C).sum(axis=0)      # (C,)
    mean = ch_sum / count
    var = jnp.maximum(ch_sumsq / count - mean * mean, 0.0)    # biased variance
    inv_std = lax.rsqrt(var + EPS)

    # out = gamma*((x-mean)*inv_std*bn_w + bn_b) + beta == x*scale + shift
    scale = gw * inv_std[None, :]                             # (N, C)
    shift = gb - scale * mean[None, :]
    scale2d = scale.reshape(R, 1)
    shift2d = shift.reshape(R, 1)

    # ---- pass 2: normalize (1 read + 1 write of x) --------------------------
    out2d = pl.pallas_call(
        _normalize_kernel,
        grid=grid,
        in_specs=[pl.BlockSpec((row_tile, col_tile), lambda i, j: (i, j)),
                  pl.BlockSpec((row_tile, 1), lambda i, j: (i, 0)),
                  pl.BlockSpec((row_tile, 1), lambda i, j: (i, 0))],
        out_specs=pl.BlockSpec((row_tile, col_tile), lambda i, j: (i, j)),
        out_shape=jax.ShapeDtypeStruct((R, L), x.dtype),
        compiler_params=cparams_norm,
    )(x2d, scale2d, shift2d)

    return out2d.reshape(N, C, H, W)


# --------------------------------------------------------------------------
# pure-JAX reference (mirrors the PyTorch forward, training-mode BN)
# --------------------------------------------------------------------------
def reference_forward(x, y, embed_weight, bn_weights, bn_biases,
                      num_features_list):
    idx = FLAGS.width_mult_list.index(FLAGS.width_mult)
    c_idx = num_features_list[idx]
    num_features = max(num_features_list)

    mean = jnp.mean(x, axis=(0, 2, 3), keepdims=True)
    var = jnp.mean((x - mean) ** 2, axis=(0, 2, 3), keepdims=True)
    xhat = (x - mean) / jnp.sqrt(var + EPS)
    out = xhat * bn_weights[idx][None, :, None, None] + \
        bn_biases[idx][None, :, None, None]

    emb = embed_weight[y]
    gamma = emb[:, :num_features][:, :c_idx][:, :, None, None]
    beta = emb[:, num_features:][:, :c_idx][:, :, None, None]
    return gamma * out + beta


# --------------------------------------------------------------------------
# self-test
# --------------------------------------------------------------------------
if __name__ == "__main__":
    key = jax.random.PRNGKey(0)
    k_emb, k_rest = jax.random.split(key)

    # Module configuration: base width 4 -> num_features_list = [1, 2, 3, 4].
    num_classes = 10
    num_features_list = [1, 2, 3, 4]
    num_features = max(num_features_list)

    # Deterministic parameter init (mirrors the PyTorch __init__):
    #   embed.weight[:, :F] ~ N(1, 0.02), embed.weight[:, F:] = 0
    emb_scale = 1.0 + 0.02 * jax.random.normal(
        k_emb, (num_classes, num_features), dtype=jnp.float32)
    emb_shift = jnp.zeros((num_classes, num_features), dtype=jnp.float32)
    embed_weight = jnp.concatenate([emb_scale, emb_shift], axis=1)

    #   each nn.BatchNorm2d(i): weight = ones(i), bias = zeros(i)
    bn_weights = [jnp.ones((c,), jnp.float32) for c in num_features_list]
    bn_biases = [jnp.zeros((c,), jnp.float32) for c in num_features_list]

    def run_case(case_key, shape, width_mult, debug_tile):
        FLAGS.width_mult = width_mult
        k_x, k_y = jax.random.split(case_key)
        n = shape[0]
        x = jax.random.normal(k_x, shape, dtype=jnp.float32)
        y = jax.random.randint(k_y, (n,), 0, num_classes)

        ref = reference_forward(x, y, embed_weight, bn_weights, bn_biases,
                                num_features_list)
        # fused single-read path (default for small / VMEM-resident slabs)
        out_f = jax.block_until_ready(
            sliceable_cbn_forward(x, y, embed_weight, bn_weights, bn_biases,
                                  num_features_list))
        # streaming two-pass path (small tiles to exercise ragged tails)
        out_s = jax.block_until_ready(
            sliceable_cbn_forward(x, y, embed_weight, bn_weights, bn_biases,
                                  num_features_list, force_streaming=True,
                                  _debug_max_tile=debug_tile))
        for out in (out_f, out_s):
            assert out.shape == shape
            assert out.dtype == x.dtype
            err = float(jnp.max(jnp.abs(out - ref)))
            assert err < 1e-4, err

    keys = jax.random.split(k_rest, 3)
    run_case(keys[0], (2, 4, 16, 16), 1.0, None)        # aligned (8 x 256)
    run_case(keys[1], (2, 4, 10, 20), 1.0, (8, 128))    # ragged column tail
    run_case(keys[2], (3, 3, 5, 5), 0.75, (8, 128))     # ragged rows + width slice

    print("KERNEL_OK")
</pallas_src>

<mosaic_0001>
module attributes {stable_mosaic.version = 11 : i64} {
  func.func @_fused_bn_kernel(%arg0: i32, %arg1: memref<2x4x256xf32, #tpu.memory_space<vmem>>, %arg2: memref<2x4x1xf32, #tpu.memory_space<vmem>>, %arg3: memref<2x4x1xf32, #tpu.memory_space<vmem>>, %arg4: memref<2x4x256xf32, #tpu.memory_space<vmem>>) attributes {dimension_semantics = [#tpu.dimension_semantics<parallel>], iteration_bounds = array<i64: 1>, scalar_prefetch = 0 : i64, scratch_operands = 0 : i64, tpu.core_type = #tpu.core_type<tc>, window_params = [{transform_indices = @transform_0, window_bounds = array<i64: 2, 4, 256>}, {transform_indices = @transform_1, window_bounds = array<i64: 2, 4, 1>}, {transform_indices = @transform_2, window_bounds = array<i64: 2, 4, 1>}, {transform_indices = @transform_3, window_bounds = array<i64: 2, 4, 256>}]} {
    %c0 = arith.constant 0 : index
    %c0_0 = arith.constant 0 : index
    %c0_1 = arith.constant 0 : index
    %0 = vector.load %arg1[%c0, %c0_0, %c0_1] : memref<2x4x256xf32, #tpu.memory_space<vmem>>, vector<2x4x256xf32>
    %cst = arith.constant dense<0.000000e+00> : vector<2x4xf32>
    %1 = vector.multi_reduction <add>, %0, %cst [2] : vector<2x4x256xf32> to vector<2x4xf32>
    %2 = vector.shape_cast %1 : vector<2x4xf32> to vector<2x4x1xf32>
    %3 = arith.mulf %0, %0 : vector<2x4x256xf32>
    %cst_2 = arith.constant dense<0.000000e+00> : vector<2x4xf32>
    %4 = vector.multi_reduction <add>, %3, %cst_2 [2] : vector<2x4x256xf32> to vector<2x4xf32>
    %5 = vector.shape_cast %4 : vector<2x4xf32> to vector<2x4x1xf32>
    %cst_3 = arith.constant dense<0.000000e+00> : vector<4x1xf32>
    %6 = vector.multi_reduction <add>, %2, %cst_3 [0] : vector<2x4x1xf32> to vector<4x1xf32>
    %7 = vector.shape_cast %6 : vector<4x1xf32> to vector<1x4x1xf32>
    %cst_4 = arith.constant dense<0.000000e+00> : vector<4x1xf32>
    %8 = vector.multi_reduction <add>, %5, %cst_4 [0] : vector<2x4x1xf32> to vector<4x1xf32>
    %9 = vector.shape_cast %8 : vector<4x1xf32> to vector<1x4x1xf32>
    %cst_5 = arith.constant 0.001953125 : f32
    %10 = vector.broadcast %cst_5 : f32 to vector<1x4x1xf32>
    %11 = arith.mulf %7, %10 : vector<1x4x1xf32>
    %cst_6 = arith.constant 0.001953125 : f32
    %12 = vector.broadcast %cst_6 : f32 to vector<1x4x1xf32>
    %13 = arith.mulf %9, %12 : vector<1x4x1xf32>
    %14 = arith.mulf %11, %11 : vector<1x4x1xf32>
    %15 = arith.subf %13, %14 : vector<1x4x1xf32>
    %cst_7 = arith.constant 0.000000e+00 : f32
    %16 = vector.broadcast %cst_7 : f32 to vector<1x4x1xf32>
    %17 = arith.maximumf %15, %16 : vector<1x4x1xf32>
    %cst_8 = arith.constant 9.99999974E-6 : f32
    %18 = vector.broadcast %cst_8 : f32 to vector<1x4x1xf32>
    %19 = arith.addf %17, %18 : vector<1x4x1xf32>
    %20 = math.rsqrt %19 : vector<1x4x1xf32>
    %c0_9 = arith.constant 0 : index
    %c0_10 = arith.constant 0 : index
    %c0_11 = arith.constant 0 : index
    %21 = vector.load %arg2[%c0_9, %c0_10, %c0_11] : memref<2x4x1xf32, #tpu.memory_space<vmem>>, vector<2x4x1xf32>
    %22 = vector.broadcast %20 : vector<1x4x1xf32> to vector<2x4x1xf32>
    %23 = arith.mulf %21, %22 : vector<2x4x1xf32>
    %c0_12 = arith.constant 0 : index
    %c0_13 = arith.constant 0 : index
    %c0_14 = arith.constant 0 : index
    %24 = vector.load %arg3[%c0_12, %c0_13, %c0_14] : memref<2x4x1xf32, #tpu.memory_space<vmem>>, vector<2x4x1xf32>
    %25 = vector.broadcast %11 : vector<1x4x1xf32> to vector<2x4x1xf32>
    %26 = arith.mulf %23, %25 : vector<2x4x1xf32>
    %27 = arith.subf %24, %26 : vector<2x4x1xf32>
    %28 = vector.broadcast %23 : vector<2x4x1xf32> to vector<2x4x256xf32>
    %29 = arith.mulf %0, %28 : vector<2x4x256xf32>
    %30 = vector.broadcast %27 : vector<2x4x1xf32> to vector<2x4x256xf32>
    %31 = arith.addf %29, %30 : vector<2x4x256xf32>
    %c0_15 = arith.constant 0 : index
    %c0_16 = arith.constant 0 : index
    %c0_17 = arith.constant 0 : index
    %32 = vector.load %arg4[%c0_15, %c0_16, %c0_17] : memref<2x4x256xf32, #tpu.memory_space<vmem>>, vector<2x4x256xf32>
    tpu.vector_store %arg4[%c0_15, %c0_16, %c0_17], %31 {strides = array<i32>} : memref<2x4x256xf32, #tpu.memory_space<vmem>>, vector<2x4x256xf32>,
    return
  }
  func.func @transform_0(%arg0: i32) -> (i32, i32, i32) {
    %c0_i32 = arith.constant 0 : i32
    %c0_i32_0 = arith.constant 0 : i32
    %c0_i32_1 = arith.constant 0 : i32
    return %c0_i32, %arg0, %c0_i32_0 : i32, i32, i32
  }
  func.func @transform_1(%arg0: i32) -> (i32, i32, i32) {
    %c0_i32 = arith.constant 0 : i32
    %c0_i32_0 = arith.constant 0 : i32
    %c0_i32_1 = arith.constant 0 : i32
    return %c0_i32, %arg0, %c0_i32_0 : i32, i32, i32
  }
  func.func @transform_2(%arg0: i32) -> (i32, i32, i32) {
    %c0_i32 = arith.constant 0 : i32
    %c0_i32_0 = arith.constant 0 : i32
    %c0_i32_1 = arith.constant 0 : i32
    return %c0_i32, %arg0, %c0_i32_0 : i32, i32, i32
  }
  func.func @transform_3(%arg0: i32) -> (i32, i32, i32) {
    %c0_i32 = arith.constant 0 : i32
    %c0_i32_0 = arith.constant 0 : i32
    %c0_i32_1 = arith.constant 0 : i32
    return %c0_i32, %arg0, %c0_i32_0 : i32, i32, i32
  }
}

</mosaic_0001>

<llo_original>
// kernel: tpu_custom_call.1
$region0: #{tpu_custom_call.1}
  #allocation0 [shape = 'u32[]', space=smem, size = 0x4, offset = 0x4, fixed_abs, tag = 'smem constant byte address 0x4 - core index']
  #allocation1 [shape = 'u32[144,128]{1,0:T(1,128)}', space=vmem, size = 0x12000, scoped, tag = 'internal scratch']
  %s0 = inlined_call_operand.vmem [shape: f32[2,4,256], index: 0, kind: input, shape index: {}]
  %s1 = inlined_call_operand.vmem [shape: f32[2,4,1], index: 1, kind: input, shape index: {}]
  %s2 = inlined_call_operand.vmem [shape: f32[2,4,1], index: 2, kind: input, shape index: {}]
  %s3 = inlined_call_operand.hbm [shape: f32[2,4,256], index: 3, kind: output, shape index: {}]
  %s4 = sld [smem:[#allocation0]]
  $region22: #{tpu_custom_call.1} parent=0
    _
  %s6 = ssub.s32 1, %s4
  %s7 = scalar_select 0, %s6, %s4
  $region1: #{tpu_custom_call.1} parent=0
    #allocation2 [shape = 'u8[8192]{0}', space=vmem, size = 0x2000, scoped, tag = 'output window, operand 0, single buffered']
    #allocation3 [shape = 's32[1]{0}', space=sflag, size = 0x4, scoped, tag = 'scoped memory for tpu_custom_call.1']
    %8 = vsyncpa [#allocation3], 0
    // Predicated region
    $region2: #{tpu_custom_call.1} parent=1 // pred_check
      _
    $region3: #{tpu_custom_call.1} parent=1 // pred_check_branch
      %10 = sbr.rel (0) target = $region5
    $region4: #{tpu_custom_call.1} parent=1 // pred_region
      _
    $region5: #{tpu_custom_call.1} parent=1 // pred_fallthru
      _
    // Predicated region
    $region6: #{tpu_custom_call.1} parent=1 // pred_check
      _
    $region7: #{tpu_custom_call.1} parent=1 // pred_check_branch
      %12 = sbr.rel (0) target = $region9
    $region8: #{tpu_custom_call.1} parent=1 // pred_region
      _
    $region9: #{tpu_custom_call.1} parent=1 // pred_fallthru
      _
    // Predicated region
    $region10: #{tpu_custom_call.1} parent=1 // pred_check
      _
    $region11: #{tpu_custom_call.1} parent=1 // pred_check_branch
      %14 = sbr.rel (0) target = $region13
    $region12: #{tpu_custom_call.1} parent=1 // pred_region
      _
    $region13: #{tpu_custom_call.1} parent=1 // pred_fallthru
      _
    %v15 = vld [vmem:[%s0] sm:$0xff]
    %v16 = vld [vmem:[%s0 + $0x8] sm:$0xff]
    %v19 = vcombine.high %v15, %v15
    %v20 = vcombine.high %v16, %v16
    %vm23 = vcmask 1043456
    %v24 = vsel %vm23, %v15, 0.0
    %v25 = vsel %vm23, %v19, 0.0
    %v26 = vadd.f32 %v24, %v25
    %27 = vadd.xlane.f32.xlu0 %v26
    %v28 = vpop.xlane.xlu0 %27
    %v29 = vsel %vm23, %v16, 0.0
    %v30 = vsel %vm23, %v20, 0.0
    %v31 = vadd.f32 %v29, %v30
    %32 = vadd.xlane.f32.xlu0 %v31
    %v33 = vpop.xlane.xlu0 %32
    %v34 = vmul.f32 %v15, %v15
    %v35 = vmul.f32 %v16, %v16
    %v38 = vcombine.high %v34, %v34
    %v39 = vcombine.high %v35, %v35
    %v42 = vsel %vm23, %v34, 0.0
    %v43 = vsel %vm23, %v38, 0.0
    %v44 = vadd.f32 %v42, %v43
    %45 = vadd.xlane.f32.xlu0 %v44
    %v46 = vpop.xlane.xlu0 %45
    %v47 = vsel %vm23, %v35, 0.0
    %v48 = vsel %vm23, %v39, 0.0
    %v49 = vadd.f32 %v47, %v48
    %50 = vadd.xlane.f32.xlu0 %v49
    %v51 = vpop.xlane.xlu0 %50
    %v52 = vsel %vm23, %v28, 0.0
    %v53 = vsel %vm23, %v33, 0.0
    %v54 = vadd.f32 %v52, %v53
    %v55 = vsel %vm23, %v46, 0.0
    %v56 = vsel %vm23, %v51, 0.0
    %v57 = vadd.f32 %v55, %v56
    %v58 = vmul.f32 %v54, 0.001953125
    %v59 = vmul.f32 %v57, 0.001953125
    %v60 = vmul.f32 %v58, %v58
    %v61 = vsub.f32 %v59, %v60
    %v62 = vmax.f32 %v61, 0.0
    %v63 = vadd.f32 %v62, 1e-05
    %v64 = vrsqrt.pop %v63
    %v65 = vld [vmem:[%s1] sm:$0xf]
    %v66 = vld [vmem:[%s1 + $0x4] sm:$0xf]
    %v67 = vmul.f32 %v65, %v64
    %v68 = vmul.f32 %v66, %v64
    %v69 = vld [vmem:[%s2] sm:$0xf]
    %v70 = vld [vmem:[%s2 + $0x4] sm:$0xf]
    %v71 = vmul.f32 %v67, %v58
    %v72 = vmul.f32 %v68, %v58
    %v73 = vsub.f32 %v69, %v71
    %v74 = vsub.f32 %v70, %v72
    %76 = vset.pattern.permute.xlu0 0
    %77 = vperm.xlu0 %76, %v67
    %v78 = vpop.permute.xlu0 %77
    %80 = vset.pattern.permute.xlu0 0
    %81 = vperm.xlu0 %80, %v68
    %v82 = vpop.permute.xlu0 %81
    %v84 = vunpack.c.l.s4 839922192
    %v85 = vunpack.c.0.s8 %v84
    %v86 = vlaneseq
    %v87 = vshrl.u32 %v86, 7
    %v88 = vsub.s32 %v85, %v87
    %v89 = vrot.slane %v78, %v88
    %v91 = vunpack.c.l.s4 839922192
    %v92 = vunpack.c.0.s8 %v91
    %v93 = vlaneseq
    %v94 = vshrl.u32 %v93, 7
    %v95 = vsub.s32 %v92, %v94
    %v96 = vrot.slane %v82, %v95
    %v99 = vmul.f32 %v15, %v89
    %v100 = vmul.f32 %v16, %v96
    %102 = vset.pattern.permute.xlu0 0
    %103 = vperm.xlu0 %102, %v73
    %v104 = vpop.permute.xlu0 %103
    %106 = vset.pattern.permute.xlu0 0
    %107 = vperm.xlu0 %106, %v74
    %v108 = vpop.permute.xlu0 %107
    %v110 = vunpack.c.l.s4 839922192
    %v111 = vunpack.c.0.s8 %v110
    %v112 = vlaneseq
    %v113 = vshrl.u32 %v112, 7
    %v114 = vsub.s32 %v111, %v113
    %v115 = vrot.slane %v104, %v114
    %v117 = vunpack.c.l.s4 839922192
    %v118 = vunpack.c.0.s8 %v117
    %v119 = vlaneseq
    %v120 = vshrl.u32 %v119, 7
    %v121 = vsub.s32 %v118, %v120
    %v122 = vrot.slane %v108, %v121
    %v125 = vadd.f32 %v99, %v115
    %v126 = vadd.f32 %v100, %v122
    %127 = vst [vmem:[#allocation2] sm:$0xff] %v125
    %128 = vst [vmem:[#allocation2 + $0x8] sm:$0xff] %v126
    // Predicated region
    $region14: #{tpu_custom_call.1} parent=1 // pred_check
      _
    $region15: #{tpu_custom_call.1} parent=1 // pred_check_branch
      %130 = sbr.rel (0) target = $region17
    $region16: #{tpu_custom_call.1} parent=1 // pred_region
      %s132 = ssub.s32 256, 256
      %133 = vsyncadd [#allocation3], %s132
      %s134 = sshll.u32 [#allocation2], 4
      %s135 = int_to_ptr.vmem [resolvable:$true] %s134
      %140 = dma.vmem_to_hbm [thread:$0]  %s135, 256, %s3, [#allocation3], 128, 128, 8
    $region17: #{tpu_custom_call.1} parent=1 // pred_fallthru
      _
    // Predicated region
    $region18: #{tpu_custom_call.1} parent=1 // pred_check
      _
    $region19: #{tpu_custom_call.1} parent=1 // pred_check_branch
      %142 = sbr.rel (0) target = $region21
    $region20: #{tpu_custom_call.1} parent=1 // pred_region
      %143 = dma.done [#allocation3], 256
    $region21: #{tpu_custom_call.1} parent=1 // pred_fallthru
      _
    %144 = vsyncpa [#allocation3], 1

</llo_original>
